<compile_context>
chip_gen: v7x
topology: tpu7x:2x2x1
jax: 0.10.0
libtpu: 0.0.40
codegen_flags: <defaults>
</compile_context>

<pallas_src>
import functools

import jax
import jax.numpy as jnp
from jax.experimental import pallas as pl
from jax.experimental.pallas import tpu as pltpu


def _round_up(x, m):
    return ((x + m - 1) // m) * m


def discriminator_kernel(x_ref, w1_ref, b1_ref, w2_ref, b2_ref, w3_ref, b3_ref,
                         o_ref):
    # In-kernel f32 -> bf16 cast of the x tile (VPU work hidden under DMA/MXU).
    x_bf = x_ref[...].astype(jnp.bfloat16)

    # Layer 1: (tb,512)bf16 @ (512,256)bf16 -> f32 acc, +b1, tanh
    h1 = jnp.tanh(
        jnp.dot(x_bf, w1_ref[...], preferred_element_type=jnp.float32)
        + b1_ref[...])

    # Layer 2: (tb,256)bf16 @ (256,128)bf16 -> f32 acc, +b2, tanh
    h2 = jnp.tanh(
        jnp.dot(h1.astype(jnp.bfloat16), w2_ref[...],
                preferred_element_type=jnp.float32)
        + b2_ref[...])

    # Layer 3, lane-dense: contract the 128-feature axis of w3 (1,128) against
    # the last axis of h2 (tb,128) -> logits of shape (1, tb).
    logits = jax.lax.dot_general(
        w3_ref[...], h2,
        dimension_numbers=(((1,), (1,)), ((), ())),
        preferred_element_type=jnp.float32) + b3_ref[...]

    # Exact sigmoid (EUP exp + exact divide) on full-lane vregs.
    o_ref[...] = (1.0 / (1.0 + jnp.exp(-logits))).astype(o_ref.dtype)


@functools.partial(jax.jit, static_argnames=("tb",))
def discriminator_forward(x, params, *, tb=1024):
    """x: (B, 512) f32.  params: (w1,b1,w2,b2,w3,b3) with
       w1 (512,256), b1 (1,256), w2 (256,128), b2 (1,128),
       w3 (1,128),  b3 (1,1).  Returns (B, 1) f32."""
    w1, b1, w2, b2, w3, b3 = params
    B = x.shape[0]

    # Tile selection:
    #  * large B: multiple of 128, capped so nb >= 2 (both v7x TCs busy).
    #  * small B: a single tile of exactly B rows (full-dim block, no pad).
    if B >= 256:
        tb_eff = min(tb, _round_up(pl.cdiv(B, 2), 128))
    else:
        tb_eff = B
    nb = pl.cdiv(B, tb_eff)
    Bp = nb * tb_eff

    # bf16 weights for the two MXU layers; x stays f32 (cast in-kernel);
    # w3/b3 stay f32 (VPU/MXU-trivial layer, no bandwidth to save).
    w1_bf = w1.astype(jnp.bfloat16)
    w2_bf = w2.astype(jnp.bfloat16)

    const = lambda shape: pl.BlockSpec(shape, lambda i: (0,) * len(shape))

    # VMEM budget (worst-case double buffering) with headroom; safe on v7x
    # (64 MiB physical) as well as v5e/v6e.
    est = (
        2 * (512 * 256 + 256 * 128) * 2              # bf16 weights
        + 2 * 8 * (256 + 128 + 128 + 1) * 4          # f32 biases/w3 (sublane pad)
        + 2 * tb_eff * 512 * 4                       # f32 x tiles (2 bufs)
        + 2 * 8 * max(tb_eff, 128) * 4               # (1,tb) out tiles (2 bufs)
        + tb_eff * (512 * 2 + 256 * 4 + 128 * 4)     # bf16 x copy + f32 h1,h2
    )
    vmem_limit = min(max(int(1.5 * est) + (2 << 20), 8 << 20), 40 << 20)

    out = pl.pallas_call(
        discriminator_kernel,
        out_shape=jax.ShapeDtypeStruct((1, Bp), jnp.float32),
        grid=(nb,),
        in_specs=[
            pl.BlockSpec((tb_eff, 512), lambda i: (i, 0)),  # x: tiled over batch
            const((512, 256)), const((1, 256)),             # w1, b1 resident
            const((256, 128)), const((1, 128)),             # w2, b2 resident
            const((1, 128)), const((1, 1)),                 # w3, b3 resident
        ],
        out_specs=pl.BlockSpec((1, tb_eff), lambda i: (0, i)),  # lane-dense
        compiler_params=pltpu.CompilerParams(
            dimension_semantics=("parallel",),
            vmem_limit_bytes=int(vmem_limit),
        ),
    )(x, w1_bf, b1, w2_bf, b2, w3, b3)

    # (1, Bp) -> (B, 1); any ragged-tail garbage rows are dropped here.
    return out[0, :B, None]


def init_params(key):
    """Deterministic init mimicking PyTorch's default Linear init
    (uniform(-1/sqrt(fan_in), 1/sqrt(fan_in))).  w3 is stored as (1,128)."""
    dims = [(512, 256), (256, 128), (128, 1)]
    params = []
    for i, (fan_in, fan_out) in enumerate(dims):
        kw, kb = jax.random.split(jax.random.fold_in(key, i))
        bound = 1.0 / jnp.sqrt(jnp.float32(fan_in))
        if fan_out == 1:
            w = jax.random.uniform(kw, (1, fan_in), jnp.float32,
                                   minval=-bound, maxval=bound)
        else:
            w = jax.random.uniform(kw, (fan_in, fan_out), jnp.float32,
                                   minval=-bound, maxval=bound)
        b = jax.random.uniform(kb, (1, fan_out), jnp.float32,
                               minval=-bound, maxval=bound)
        params.extend([w, b])
    return tuple(params)


if __name__ == "__main__":
    key = jax.random.PRNGKey(0)
    params = init_params(key)

    B = 8  # small batch
    x = jax.random.normal(jax.random.fold_in(key, 100), (B, 512), jnp.float32)

    out = discriminator_forward(x, params)
    out = jax.block_until_ready(out)

    # sanity check against plain-JAX f32 reference (tolerance accounts for the
    # bf16 weight/activation cast in the first two layers)
    w1, b1, w2, b2, w3, b3 = params
    h1 = jnp.tanh(x @ w1 + b1)
    h2 = jnp.tanh(h1 @ w2 + b2)
    ref = jax.nn.sigmoid(h2 @ w3.T + b3)

    assert out.shape == (B, 1)
    assert jnp.allclose(out, ref, atol=2e-2, rtol=2e-2), (
        jnp.max(jnp.abs(out - ref)))

    print("KERNEL_OK")
</pallas_src>

<mosaic_0001>
module attributes {stable_mosaic.version = 11 : i64} {
  func.func @discriminator_kernel(%arg0: i32, %arg1: memref<8x512xf32, #tpu.memory_space<vmem>>, %arg2: memref<512x256xbf16, #tpu.memory_space<vmem>>, %arg3: memref<1x256xf32, #tpu.memory_space<vmem>>, %arg4: memref<256x128xbf16, #tpu.memory_space<vmem>>, %arg5: memref<1x128xf32, #tpu.memory_space<vmem>>, %arg6: memref<1x128xf32, #tpu.memory_space<vmem>>, %arg7: memref<1x1xf32, #tpu.memory_space<vmem>>, %arg8: memref<1x8xf32, #tpu.memory_space<vmem>>) attributes {dimension_semantics = [#tpu.dimension_semantics<parallel>], iteration_bounds = array<i64: 1>, scalar_prefetch = 0 : i64, scratch_operands = 0 : i64, tpu.core_type = #tpu.core_type<tc>, window_params = [{transform_indices = @transform_0, window_bounds = array<i64: 8, 512>}, {pipeline_mode = #tpu.pipeline_mode<synchronous>, transform_indices = @transform_1, window_bounds = array<i64: 512, 256>}, {pipeline_mode = #tpu.pipeline_mode<synchronous>, transform_indices = @transform_2, window_bounds = array<i64: 1, 256>}, {pipeline_mode = #tpu.pipeline_mode<synchronous>, transform_indices = @transform_3, window_bounds = array<i64: 256, 128>}, {pipeline_mode = #tpu.pipeline_mode<synchronous>, transform_indices = @transform_4, window_bounds = array<i64: 1, 128>}, {pipeline_mode = #tpu.pipeline_mode<synchronous>, transform_indices = @transform_5, window_bounds = array<i64: 1, 128>}, {pipeline_mode = #tpu.pipeline_mode<synchronous>, transform_indices = @transform_6, window_bounds = array<i64: 1, 1>}, {transform_indices = @transform_7, window_bounds = array<i64: 1, 8>}]} {
    %c0 = arith.constant 0 : index
    %c0_0 = arith.constant 0 : index
    %0 = vector.load %arg1[%c0, %c0_0] : memref<8x512xf32, #tpu.memory_space<vmem>>, vector<8x512xf32>
    %1 = arith.truncf %0 : vector<8x512xf32> to vector<8x512xbf16>
    %c0_1 = arith.constant 0 : index
    %c0_2 = arith.constant 0 : index
    %2 = vector.load %arg2[%c0_1, %c0_2] : memref<512x256xbf16, #tpu.memory_space<vmem>>, vector<512x256xbf16>
    %cst = arith.constant dense<0.000000e+00> : vector<8x256xf32>
    %3 = tpu.matmul %1, %2, %cst {dimension_numbers = #tpu.dot_dimension_numbers<[1], [0], [0], [1], [0, 0, 1, 1], [], []>} : vector<8x512xbf16>, vector<512x256xbf16>, vector<8x256xf32> -> vector<8x256xf32>
    %c0_3 = arith.constant 0 : index
    %c0_4 = arith.constant 0 : index
    %4 = vector.load %arg3[%c0_3, %c0_4] : memref<1x256xf32, #tpu.memory_space<vmem>>, vector<1x256xf32>
    %5 = vector.broadcast %4 : vector<1x256xf32> to vector<8x256xf32>
    %6 = arith.addf %3, %5 : vector<8x256xf32>
    %7 = math.tanh %6 : vector<8x256xf32>
    %8 = arith.truncf %7 : vector<8x256xf32> to vector<8x256xbf16>
    %c0_5 = arith.constant 0 : index
    %c0_6 = arith.constant 0 : index
    %9 = vector.load %arg4[%c0_5, %c0_6] : memref<256x128xbf16, #tpu.memory_space<vmem>>, vector<256x128xbf16>
    %cst_7 = arith.constant dense<0.000000e+00> : vector<8x128xf32>
    %10 = tpu.matmul %8, %9, %cst_7 {dimension_numbers = #tpu.dot_dimension_numbers<[1], [0], [0], [1], [0, 0, 1, 1], [], []>} : vector<8x256xbf16>, vector<256x128xbf16>, vector<8x128xf32> -> vector<8x128xf32>
    %c0_8 = arith.constant 0 : index
    %c0_9 = arith.constant 0 : index
    %11 = vector.load %arg5[%c0_8, %c0_9] : memref<1x128xf32, #tpu.memory_space<vmem>>, vector<1x128xf32>
    %12 = vector.broadcast %11 : vector<1x128xf32> to vector<8x128xf32>
    %13 = arith.addf %10, %12 : vector<8x128xf32>
    %14 = math.tanh %13 : vector<8x128xf32>
    %c0_10 = arith.constant 0 : index
    %c0_11 = arith.constant 0 : index
    %15 = vector.load %arg6[%c0_10, %c0_11] : memref<1x128xf32, #tpu.memory_space<vmem>>, vector<1x128xf32>
    %cst_12 = arith.constant dense<0.000000e+00> : vector<1x8xf32>
    %16 = tpu.matmul %15, %14, %cst_12 {dimension_numbers = #tpu.dot_dimension_numbers<[1], [1], [0], [0], [0, 0, 1, 0], [], []>} : vector<1x128xf32>, vector<8x128xf32>, vector<1x8xf32> -> vector<1x8xf32>
    %c0_13 = arith.constant 0 : index
    %c0_14 = arith.constant 0 : index
    %17 = vector.load %arg7[%c0_13, %c0_14] : memref<1x1xf32, #tpu.memory_space<vmem>>, vector<1x1xf32>
    %18 = vector.broadcast %17 : vector<1x1xf32> to vector<1x8xf32>
    %19 = arith.addf %16, %18 : vector<1x8xf32>
    %cst_15 = arith.constant 0.000000e+00 : f32
    %20 = vector.broadcast %cst_15 : f32 to vector<1x8xf32>
    %21 = arith.subf %20, %19 : vector<1x8xf32>
    %22 = math.exp %21 : vector<1x8xf32>
    %cst_16 = arith.constant 1.000000e+00 : f32
    %23 = vector.broadcast %cst_16 : f32 to vector<1x8xf32>
    %24 = arith.addf %23, %22 : vector<1x8xf32>
    %cst_17 = arith.constant 1.000000e+00 : f32
    %25 = vector.broadcast %cst_17 : f32 to vector<1x8xf32>
    %26 = arith.divf %25, %24 : vector<1x8xf32>
    %c0_18 = arith.constant 0 : index
    %c0_19 = arith.constant 0 : index
    %27 = vector.load %arg8[%c0_18, %c0_19] : memref<1x8xf32, #tpu.memory_space<vmem>>, vector<1x8xf32>
    tpu.vector_store %arg8[%c0_18, %c0_19], %26 {strides = array<i32>} : memref<1x8xf32, #tpu.memory_space<vmem>>, vector<1x8xf32>,
    return
  }
  func.func @transform_0(%arg0: i32) -> (i32, i32) {
    %c0_i32 = arith.constant 0 : i32
    %c0_i32_0 = arith.constant 0 : i32
    return %arg0, %c0_i32 : i32, i32
  }
  func.func @transform_1(%arg0: i32) -> (i32, i32) {
    %c0_i32 = arith.constant 0 : i32
    %c0_i32_0 = arith.constant 0 : i32
    %c0_i32_1 = arith.constant 0 : i32
    return %c0_i32, %c0_i32_0 : i32, i32
  }
  func.func @transform_2(%arg0: i32) -> (i32, i32) {
    %c0_i32 = arith.constant 0 : i32
    %c0_i32_0 = arith.constant 0 : i32
    %c0_i32_1 = arith.constant 0 : i32
    return %c0_i32, %c0_i32_0 : i32, i32
  }
  func.func @transform_3(%arg0: i32) -> (i32, i32) {
    %c0_i32 = arith.constant 0 : i32
    %c0_i32_0 = arith.constant 0 : i32
    %c0_i32_1 = arith.constant 0 : i32
    return %c0_i32, %c0_i32_0 : i32, i32
  }
  func.func @transform_4(%arg0: i32) -> (i32, i32) {
    %c0_i32 = arith.constant 0 : i32
    %c0_i32_0 = arith.constant 0 : i32
    %c0_i32_1 = arith.constant 0 : i32
    return %c0_i32, %c0_i32_0 : i32, i32
  }
  func.func @transform_5(%arg0: i32) -> (i32, i32) {
    %c0_i32 = arith.constant 0 : i32
    %c0_i32_0 = arith.constant 0 : i32
    %c0_i32_1 = arith.constant 0 : i32
    return %c0_i32, %c0_i32_0 : i32, i32
  }
  func.func @transform_6(%arg0: i32) -> (i32, i32) {
    %c0_i32 = arith.constant 0 : i32
    %c0_i32_0 = arith.constant 0 : i32
    %c0_i32_1 = arith.constant 0 : i32
    return %c0_i32, %c0_i32_0 : i32, i32
  }
  func.func @transform_7(%arg0: i32) -> (i32, i32) {
    %c0_i32 = arith.constant 0 : i32
    %c0_i32_0 = arith.constant 0 : i32
    return %c0_i32, %arg0 : i32, i32
  }
}

</mosaic_0001>

<llo_original>
// kernel: discriminator_forward.1
$region0: #{discriminator_forward.1}
  #allocation0 [shape = 'u32[]', space=smem, size = 0x4, offset = 0x4, fixed_abs, tag = 'smem constant byte address 0x4 - core index']
  #allocation1 [shape = 'u32[144,128]{1,0:T(1,128)}', space=vmem, size = 0x12000, scoped, tag = 'internal scratch']
  #allocation2 [shape = 'f32[1,1]{1,0:T(1,128)S(1)}', space=vmem, size = 0x200, scoped, tag = 'scoped memory for discriminator_forward.1']
  %s0 = inlined_call_operand.vmem [shape: f32[8,512], index: 0, kind: input, shape index: {}]
  %s1 = inlined_call_operand.vmem [shape: bf16[512,256], index: 1, kind: input, shape index: {}]
  %s2 = inlined_call_operand.vmem [shape: f32[1,256], index: 2, kind: input, shape index: {}]
  %s3 = inlined_call_operand.vmem [shape: bf16[256,128], index: 3, kind: input, shape index: {}]
  %s4 = inlined_call_operand.vmem [shape: f32[1,128], index: 4, kind: input, shape index: {}]
  %s5 = inlined_call_operand.vmem [shape: f32[1,128], index: 5, kind: input, shape index: {}]
  %s6 = inlined_call_operand.<no memory space> [shape: f32[1,1], index: 6, kind: input, shape index: {}]
  %s7 = inlined_call_operand.hbm [shape: f32[1,8], index: 7, kind: output, shape index: {}]
  %s8 = sld [smem:[#allocation0]]
  $region38: #{discriminator_forward.1} parent=0
    _
  %s10 = ssub.s32 1, %s8
  %s11 = scalar_select 0, %s10, %s8
  %v12 = vstv %s6
  %13 = vst [vmem:[#allocation2] sm:$0x1] %v12
  $region1: #{discriminator_forward.1} parent=0
    #allocation3 [shape = 'u8[512]{0}', space=vmem, size = 0x400, scoped, tag = 'output window, operand 0, single buffered']
    #allocation4 [shape = 's32[1]{0}', space=sflag, size = 0x4, scoped, tag = 'scoped memory for discriminator_forward.1']
    %14 = vsyncpa [#allocation4], 0
    // Predicated region
    $region2: #{discriminator_forward.1} parent=1 // pred_check
      _
    $region3: #{discriminator_forward.1} parent=1 // pred_check_branch
      %16 = sbr.rel (0) target = $region5
    $region4: #{discriminator_forward.1} parent=1 // pred_region
      _
    $region5: #{discriminator_forward.1} parent=1 // pred_fallthru
      _
    // Predicated region
    $region6: #{discriminator_forward.1} parent=1 // pred_check
      _
    $region7: #{discriminator_forward.1} parent=1 // pred_check_branch
      %18 = sbr.rel (0) target = $region9
    $region8: #{discriminator_forward.1} parent=1 // pred_region
      _
    $region9: #{discriminator_forward.1} parent=1 // pred_fallthru
      _
    // Predicated region
    $region10: #{discriminator_forward.1} parent=1 // pred_check
      _
    $region11: #{discriminator_forward.1} parent=1 // pred_check_branch
      %20 = sbr.rel (0) target = $region13
    $region12: #{discriminator_forward.1} parent=1 // pred_region
      _
    $region13: #{discriminator_forward.1} parent=1 // pred_fallthru
      _
    // Predicated region
    $region14: #{discriminator_forward.1} parent=1 // pred_check
      _
    $region15: #{discriminator_forward.1} parent=1 // pred_check_branch
      %22 = sbr.rel (0) target = $region17
    $region16: #{discriminator_forward.1} parent=1 // pred_region
      _
    $region17: #{discriminator_forward.1} parent=1 // pred_fallthru
      _
    // Predicated region
    $region18: #{discriminator_forward.1} parent=1 // pred_check
      _
    $region19: #{discriminator_forward.1} parent=1 // pred_check_branch
      %24 = sbr.rel (0) target = $region21
    $region20: #{discriminator_forward.1} parent=1 // pred_region
      _
    $region21: #{discriminator_forward.1} parent=1 // pred_fallthru
      _
    // Predicated region
    $region22: #{discriminator_forward.1} parent=1 // pred_check
      _
    $region23: #{discriminator_forward.1} parent=1 // pred_check_branch
      %26 = sbr.rel (0) target = $region25
    $region24: #{discriminator_forward.1} parent=1 // pred_region
      _
    $region25: #{discriminator_forward.1} parent=1 // pred_fallthru
      _
    // Predicated region
    $region26: #{discriminator_forward.1} parent=1 // pred_check
      _
    $region27: #{discriminator_forward.1} parent=1 // pred_check_branch
      %28 = sbr.rel (0) target = $region29
    $region28: #{discriminator_forward.1} parent=1 // pred_region
      _
    $region29: #{discriminator_forward.1} parent=1 // pred_fallthru
      _
    %v30 = vld [vmem:[%s0] sm:$0xff]
    %v31 = vld [vmem:[%s0 + $0x8] sm:$0xff]
    %v32 = vld [vmem:[%s0 + $0x10] sm:$0xff]
    %v33 = vld [vmem:[%s0 + $0x18] sm:$0xff]
    %v34 = vpack.c.bf16 %v30, %v30
    %v35 = vpack.c.bf16 %v31, %v31
    %v36 = vpack.c.bf16 %v32, %v32
    %v37 = vpack.c.bf16 %v33, %v33
    %v38 = vld [vmem:[%s1] sm:$0xff]
    %v39 = vld [vmem:[%s1 + $0x8] sm:$0xff]
    %v40 = vld [vmem:[%s1 + $0x10] sm:$0xff]
    %v41 = vld [vmem:[%s1 + $0x18] sm:$0xff]
    %v42 = vld [vmem:[%s1 + $0x20] sm:$0xff]
    %v43 = vld [vmem:[%s1 + $0x28] sm:$0xff]
    %v44 = vld [vmem:[%s1 + $0x30] sm:$0xff]
    %v45 = vld [vmem:[%s1 + $0x38] sm:$0xff]
    %v46 = vld [vmem:[%s1 + $0x40] sm:$0xff]
    %v47 = vld [vmem:[%s1 + $0x48] sm:$0xff]
    %v48 = vld [vmem:[%s1 + $0x50] sm:$0xff]
    %v49 = vld [vmem:[%s1 + $0x58] sm:$0xff]
    %v50 = vld [vmem:[%s1 + $0x60] sm:$0xff]
    %v51 = vld [vmem:[%s1 + $0x68] sm:$0xff]
    %v52 = vld [vmem:[%s1 + $0x70] sm:$0xff]
    %v53 = vld [vmem:[%s1 + $0x78] sm:$0xff]
    %v54 = vld [vmem:[%s1 + $0x80] sm:$0xff]
    %v55 = vld [vmem:[%s1 + $0x88] sm:$0xff]
    %v56 = vld [vmem:[%s1 + $0x90] sm:$0xff]
    %v57 = vld [vmem:[%s1 + $0x98] sm:$0xff]
    %v58 = vld [vmem:[%s1 + $0xa0] sm:$0xff]
    %v59 = vld [vmem:[%s1 + $0xa8] sm:$0xff]
    %v60 = vld [vmem:[%s1 + $0xb0] sm:$0xff]
    %v61 = vld [vmem:[%s1 + $0xb8] sm:$0xff]
    %v62 = vld [vmem:[%s1 + $0xc0] sm:$0xff]
    %v63 = vld [vmem:[%s1 + $0xc8] sm:$0xff]
    %v64 = vld [vmem:[%s1 + $0xd0] sm:$0xff]
    %v65 = vld [vmem:[%s1 + $0xd8] sm:$0xff]
    %v66 = vld [vmem:[%s1 + $0xe0] sm:$0xff]
    %v67 = vld [vmem:[%s1 + $0xe8] sm:$0xff]
    %v68 = vld [vmem:[%s1 + $0xf0] sm:$0xff]
    %v69 = vld [vmem:[%s1 + $0xf8] sm:$0xff]
    %v70 = vld [vmem:[%s1 + $0x100] sm:$0xff]
    %v71 = vld [vmem:[%s1 + $0x108] sm:$0xff]
    %v72 = vld [vmem:[%s1 + $0x110] sm:$0xff]
    %v73 = vld [vmem:[%s1 + $0x118] sm:$0xff]
    %v74 = vld [vmem:[%s1 + $0x120] sm:$0xff]
    %v75 = vld [vmem:[%s1 + $0x128] sm:$0xff]
    %v76 = vld [vmem:[%s1 + $0x130] sm:$0xff]
    %v77 = vld [vmem:[%s1 + $0x138] sm:$0xff]
    %v78 = vld [vmem:[%s1 + $0x140] sm:$0xff]
    %v79 = vld [vmem:[%s1 + $0x148] sm:$0xff]
    %v80 = vld [vmem:[%s1 + $0x150] sm:$0xff]
    %v81 = vld [vmem:[%s1 + $0x158] sm:$0xff]
    %v82 = vld [vmem:[%s1 + $0x160] sm:$0xff]
    %v83 = vld [vmem:[%s1 + $0x168] sm:$0xff]
    %v84 = vld [vmem:[%s1 + $0x170] sm:$0xff]
    %v85 = vld [vmem:[%s1 + $0x178] sm:$0xff]
    %v86 = vld [vmem:[%s1 + $0x180] sm:$0xff]
    %v87 = vld [vmem:[%s1 + $0x188] sm:$0xff]
    %v88 = vld [vmem:[%s1 + $0x190] sm:$0xff]
    %v89 = vld [vmem:[%s1 + $0x198] sm:$0xff]
    %v90 = vld [vmem:[%s1 + $0x1a0] sm:$0xff]
    %v91 = vld [vmem:[%s1 + $0x1a8] sm:$0xff]
    %v92 = vld [vmem:[%s1 + $0x1b0] sm:$0xff]
    %v93 = vld [vmem:[%s1 + $0x1b8] sm:$0xff]
    %v94 = vld [vmem:[%s1 + $0x1c0] sm:$0xff]
    %v95 = vld [vmem:[%s1 + $0x1c8] sm:$0xff]
    %v96 = vld [vmem:[%s1 + $0x1d0] sm:$0xff]
    %v97 = vld [vmem:[%s1 + $0x1d8] sm:$0xff]
    %v98 = vld [vmem:[%s1 + $0x1e0] sm:$0xff]
    %v99 = vld [vmem:[%s1 + $0x1e8] sm:$0xff]
    %v100 = vld [vmem:[%s1 + $0x1f0] sm:$0xff]
    %v101 = vld [vmem:[%s1 + $0x1f8] sm:$0xff]
    %v102 = vld [vmem:[%s2] sm:$0x3]
    %v104 = vlaneseq
    %v105 = vshrl.u32 %v104, 7
    %v106 = vsub.s32 0, %v105
    %v107 = vrot.slane %v102, %v106
    %v108 = vlaneseq
    %v109 = vshrl.u32 %v108, 7
    %v110 = vsub.s32 1, %v109
    %v111 = vrot.slane %v102, %v110
    %v178 = vunpack.c.l.b16 %v38
    %v179 = vunpack.c.h.b16 %v38
    %v180 = vunpack.c.l.b16 %v39
    %v181 = vunpack.c.h.b16 %v39
    %v182 = vunpack.c.l.b16 %v40
    %v183 = vunpack.c.h.b16 %v40
    %v184 = vunpack.c.l.b16 %v41
    %v185 = vunpack.c.h.b16 %v41
    %v186 = vunpack.c.l.b16 %v42
    %v187 = vunpack.c.h.b16 %v42
    %v188 = vunpack.c.l.b16 %v43
    %v189 = vunpack.c.h.b16 %v43
    %v190 = vunpack.c.l.b16 %v44
    %v191 = vunpack.c.h.b16 %v44
    %v192 = vunpack.c.l.b16 %v45
    %v193 = vunpack.c.h.b16 %v45
    %v194 = vunpack.c.l.b16 %v46
    %v195 = vunpack.c.h.b16 %v46
    %v196 = vunpack.c.l.b16 %v47
    %v197 = vunpack.c.h.b16 %v47
    %v198 = vunpack.c.l.b16 %v48
    %v199 = vunpack.c.h.b16 %v48
    %v200 = vunpack.c.l.b16 %v49
    %v201 = vunpack.c.h.b16 %v49
    %v202 = vunpack.c.l.b16 %v50
    %v203 = vunpack.c.h.b16 %v50
    %v204 = vunpack.c.l.b16 %v51
    %v205 = vunpack.c.h.b16 %v51
    %v206 = vunpack.c.l.b16 %v52
    %v207 = vunpack.c.h.b16 %v52
    %v208 = vunpack.c.l.b16 %v53
    %v209 = vunpack.c.h.b16 %v53
    %v210 = vunpack.c.l.b16 %v54
    %v211 = vunpack.c.h.b16 %v54
    %v212 = vunpack.c.l.b16 %v55
    %v213 = vunpack.c.h.b16 %v55
    %v214 = vunpack.c.l.b16 %v56
    %v215 = vunpack.c.h.b16 %v56
    %v216 = vunpack.c.l.b16 %v57
    %v217 = vunpack.c.h.b16 %v57
    %v218 = vunpack.c.l.b16 %v58
    %v219 = vunpack.c.h.b16 %v58
    %v220 = vunpack.c.l.b16 %v59
    %v221 = vunpack.c.h.b16 %v59
    %v222 = vunpack.c.l.b16 %v60
    %v223 = vunpack.c.h.b16 %v60
    %v224 = vunpack.c.l.b16 %v61
    %v225 = vunpack.c.h.b16 %v61
    %v226 = vunpack.c.l.b16 %v62
    %v227 = vunpack.c.h.b16 %v62
    %v228 = vunpack.c.l.b16 %v63
    %v229 = vunpack.c.h.b16 %v63
    %v230 = vunpack.c.l.b16 %v64
    %v231 = vunpack.c.h.b16 %v64
    %v232 = vunpack.c.l.b16 %v65
    %v233 = vunpack.c.h.b16 %v65
    %v234 = vunpack.c.l.b16 %v66
    %v235 = vunpack.c.h.b16 %v66
    %v236 = vunpack.c.l.b16 %v67
    %v237 = vunpack.c.h.b16 %v67
    %v238 = vunpack.c.l.b16 %v68
    %v239 = vunpack.c.h.b16 %v68
    %v240 = vunpack.c.l.b16 %v69
    %v241 = vunpack.c.h.b16 %v69
    %v242 = vunpack.c.l.b16 %v70
    %v243 = vunpack.c.h.b16 %v70
    %v244 = vunpack.c.l.b16 %v71
    %v245 = vunpack.c.h.b16 %v71
    %v246 = vunpack.c.l.b16 %v72
    %v247 = vunpack.c.h.b16 %v72
    %v248 = vunpack.c.l.b16 %v73
    %v249 = vunpack.c.h.b16 %v73
    %v250 = vunpack.c.l.b16 %v74
    %v251 = vunpack.c.h.b16 %v74
    %v252 = vunpack.c.l.b16 %v75
    %v253 = vunpack.c.h.b16 %v75
    %v254 = vunpack.c.l.b16 %v76
    %v255 = vunpack.c.h.b16 %v76
    %v256 = vunpack.c.l.b16 %v77
    %v257 = vunpack.c.h.b16 %v77
    %v258 = vunpack.c.l.b16 %v78
    %v259 = vunpack.c.h.b16 %v78
    %v260 = vunpack.c.l.b16 %v79
    %v261 = vunpack.c.h.b16 %v79
    %v262 = vunpack.c.l.b16 %v80
    %v263 = vunpack.c.h.b16 %v80
    %v264 = vunpack.c.l.b16 %v81
    %v265 = vunpack.c.h.b16 %v81
    %v266 = vunpack.c.l.b16 %v82
    %v267 = vunpack.c.h.b16 %v82
    %v268 = vunpack.c.l.b16 %v83
    %v269 = vunpack.c.h.b16 %v83
    %v270 = vunpack.c.l.b16 %v84
    %v271 = vunpack.c.h.b16 %v84
    %v272 = vunpack.c.l.b16 %v85
    %v273 = vunpack.c.h.b16 %v85
    %v274 = vunpack.c.l.b16 %v86
    %v275 = vunpack.c.h.b16 %v86
    %v276 = vunpack.c.l.b16 %v87
    %v277 = vunpack.c.h.b16 %v87
    %v278 = vunpack.c.l.b16 %v88
    %v279 = vunpack.c.h.b16 %v88
    %v280 = vunpack.c.l.b16 %v89
    %v281 = vunpack.c.h.b16 %v89
    %v282 = vunpack.c.l.b16 %v90
    %v283 = vunpack.c.h.b16 %v90
    %v284 = vunpack.c.l.b16 %v91
    %v285 = vunpack.c.h.b16 %v91
    %v286 = vunpack.c.l.b16 %v92
    %v287 = vunpack.c.h.b16 %v92
    %v288 = vunpack.c.l.b16 %v93
    %v289 = vunpack.c.h.b16 %v93
    %v290 = vunpack.c.l.b16 %v94
    %v291 = vunpack.c.h.b16 %v94
    %v292 = vunpack.c.l.b16 %v95
    %v293 = vunpack.c.h.b16 %v95
    %v294 = vunpack.c.l.b16 %v96
    %v295 = vunpack.c.h.b16 %v96
    %v296 = vunpack.c.l.b16 %v97
    %v297 = vunpack.c.h.b16 %v97
    %v298 = vunpack.c.l.b16 %v98
    %v299 = vunpack.c.h.b16 %v98
    %v300 = vunpack.c.l.b16 %v99
    %v301 = vunpack.c.h.b16 %v99
    %v302 = vunpack.c.l.b16 %v100
    %v303 = vunpack.c.h.b16 %v100
    %v304 = vunpack.c.l.b16 %v101
    %v305 = vunpack.c.h.b16 %v101
    %v306 = vpack.c.b16 %v180, %v178
    %v307 = vpack.c.b16 %v181, %v179
    %v308 = vpack.c.b16 %v184, %v182
    %v309 = vpack.c.b16 %v185, %v183
    %v310 = vpack.c.b16 %v188, %v186
    %v311 = vpack.c.b16 %v189, %v187
    %v312 = vpack.c.b16 %v192, %v190
    %v313 = vpack.c.b16 %v193, %v191
    %v314 = vpack.c.b16 %v196, %v194
    %v315 = vpack.c.b16 %v197, %v195
    %v316 = vpack.c.b16 %v200, %v198
    %v317 = vpack.c.b16 %v201, %v199
    %v318 = vpack.c.b16 %v204, %v202
    %v319 = vpack.c.b16 %v205, %v203
    %v320 = vpack.c.b16 %v208, %v206
    %v321 = vpack.c.b16 %v209, %v207
    %v322 = vpack.c.b16 %v212, %v210
    %v323 = vpack.c.b16 %v213, %v211
    %v324 = vpack.c.b16 %v216, %v214
    %v325 = vpack.c.b16 %v217, %v215
    %v326 = vpack.c.b16 %v220, %v218
    %v327 = vpack.c.b16 %v221, %v219
    %v328 = vpack.c.b16 %v224, %v222
    %v329 = vpack.c.b16 %v225, %v223
    %v330 = vpack.c.b16 %v228, %v226
    %v331 = vpack.c.b16 %v229, %v227
    %v332 = vpack.c.b16 %v232, %v230
    %v333 = vpack.c.b16 %v233, %v231
    %v334 = vpack.c.b16 %v236, %v234
    %v335 = vpack.c.b16 %v237, %v235
    %v336 = vpack.c.b16 %v240, %v238
    %v337 = vpack.c.b16 %v241, %v239
    %v338 = vpack.c.b16 %v244, %v242
    %v339 = vpack.c.b16 %v245, %v243
    %v340 = vpack.c.b16 %v248, %v246
    %v341 = vpack.c.b16 %v249, %v247
    %v342 = vpack.c.b16 %v252, %v250
    %v343 = vpack.c.b16 %v253, %v251
    %v344 = vpack.c.b16 %v256, %v254
    %v345 = vpack.c.b16 %v257, %v255
    %v346 = vpack.c.b16 %v260, %v258
    %v347 = vpack.c.b16 %v261, %v259
    %v348 = vpack.c.b16 %v264, %v262
    %v349 = vpack.c.b16 %v265, %v263
    %v350 = vpack.c.b16 %v268, %v266
    %v351 = vpack.c.b16 %v269, %v267
    %v352 = vpack.c.b16 %v272, %v270
    %v353 = vpack.c.b16 %v273, %v271
    %v354 = vpack.c.b16 %v276, %v274
    %v355 = vpack.c.b16 %v277, %v275
    %v356 = vpack.c.b16 %v280, %v278
    %v357 = vpack.c.b16 %v281, %v279
    %v358 = vpack.c.b16 %v284, %v282
    %v359 = vpack.c.b16 %v285, %v283
    %v360 = vpack.c.b16 %v288, %v286
    %v361 = vpack.c.b16 %v289, %v287
    %v362 = vpack.c.b16 %v292, %v290
    %v363 = vpack.c.b16 %v293, %v291
    %v364 = vpack.c.b16 %v296, %v294
    %v365 = vpack.c.b16 %v297, %v295
    %v366 = vpack.c.b16 %v300, %v298
    %v367 = vpack.c.b16 %v301, %v299
    %v368 = vpack.c.b16 %v304, %v302
    %v369 = vpack.c.b16 %v305, %v303
    %434 = vmatprep.subr.bf16.mxu0 %v307
    %435 = vmatpush1.bf16.msra.mxu0 %v306
    %436 = vmatprep.subr.bf16.mxu0 %v309
    %437 = vmatpush1.bf16.msra.mxu0 %v308
    %438 = vmatprep.subr.bf16.mxu0 %v311
    %439 = vmatpush1.bf16.msra.mxu0 %v310
    %440 = vmatprep.subr.bf16.mxu0 %v313
    %441 = vmatpush1.bf16.msra.mxu0 %v312
    %442 = vmatprep.subr.bf16.mxu0 %v315
    %443 = vmatpush1.bf16.msra.mxu0 %v314
    %444 = vmatprep.subr.bf16.mxu0 %v317
    %445 = vmatpush1.bf16.msra.mxu0 %v316
    %446 = vmatprep.subr.bf16.mxu0 %v319
    %447 = vmatpush1.bf16.msra.mxu0 %v318
    %448 = vmatprep.subr.bf16.mxu0 %v321
    %449 = vmatpush1.bf16.msra.mxu0 %v320
    %450 = vmatprep.subr.bf16.mxu0 %v323
    %451 = vmatpush1.bf16.msra.mxu0 %v322
    %452 = vmatprep.subr.bf16.mxu0 %v325
    %453 = vmatpush1.bf16.msra.mxu0 %v324
    %454 = vmatprep.subr.bf16.mxu0 %v327
    %455 = vmatpush1.bf16.msra.mxu0 %v326
    %456 = vmatprep.subr.bf16.mxu0 %v329
    %457 = vmatpush1.bf16.msra.mxu0 %v328
    %458 = vmatprep.subr.bf16.mxu0 %v331
    %459 = vmatpush1.bf16.msra.mxu0 %v330
    %460 = vmatprep.subr.bf16.mxu0 %v333
    %461 = vmatpush1.bf16.msra.mxu0 %v332
    %462 = vmatprep.subr.bf16.mxu0 %v335
    %463 = vmatpush1.bf16.msra.mxu0 %v334
    %464 = vmatprep.subr.bf16.mxu0 %v337
    %465 = vmatpush1.bf16.msra.mxu0 %v336
    %466 = vmatprep.mubr.bf16.mxu0 %v35
    %467 = vmatmul.mubr.bf16.gmra.mrb[0].mxu0 %v34
    %v468 = vpop.f32.mrb[0].mxu0
    %v469 = vadd.f32 %v107, %v468
    %v470 = vpop.f32.mrb[0].mxu0
    %v471 = vadd.f32 %v111, %v470
    %v472 = vpop.f32.mrb[0].mxu0
    %v473 = vpop.f32.mrb[0].mxu0
    %474 = vdwg.mxu0
    %475 = vmatprep.subr.bf16.mxu0 %v339
    %476 = vmatpush1.bf16.msra.mxu0 %v338
    %477 = vmatprep.subr.bf16.mxu0 %v341
    %478 = vmatpush1.bf16.msra.mxu0 %v340
    %479 = vmatprep.subr.bf16.mxu0 %v343
    %480 = vmatpush1.bf16.msra.mxu0 %v342
    %481 = vmatprep.subr.bf16.mxu0 %v345
    %482 = vmatpush1.bf16.msra.mxu0 %v344
    %483 = vmatprep.subr.bf16.mxu0 %v347
    %484 = vmatpush1.bf16.msra.mxu0 %v346
    %485 = vmatprep.subr.bf16.mxu0 %v349
    %486 = vmatpush1.bf16.msra.mxu0 %v348
    %487 = vmatprep.subr.bf16.mxu0 %v351
    %488 = vmatpush1.bf16.msra.mxu0 %v350
    %489 = vmatprep.subr.bf16.mxu0 %v353
    %490 = vmatpush1.bf16.msra.mxu0 %v352
    %491 = vmatprep.subr.bf16.mxu0 %v355
    %492 = vmatpush1.bf16.msra.mxu0 %v354
    %493 = vmatprep.subr.bf16.mxu0 %v357
    %494 = vmatpush1.bf16.msra.mxu0 %v356
    %495 = vmatprep.subr.bf16.mxu0 %v359
    %496 = vmatpush1.bf16.msra.mxu0 %v358
    %497 = vmatprep.subr.bf16.mxu0 %v361
    %498 = vmatpush1.bf16.msra.mxu0 %v360
    %499 = vmatprep.subr.bf16.mxu0 %v363
    %500 = vmatpush1.bf16.msra.mxu0 %v362
    %501 = vmatprep.subr.bf16.mxu0 %v365
    %502 = vmatpush1.bf16.msra.mxu0 %v364
    %503 = vmatprep.subr.bf16.mxu0 %v367
    %504 = vmatpush1.bf16.msra.mxu0 %v366
    %505 = vmatprep.subr.bf16.mxu0 %v369
    %506 = vmatpush1.bf16.msra.mxu0 %v368
    %507 = vmatprep.mubr.bf16.mxu0 %v37
    %508 = vmatmul.mubr.bf16.gmra.mrb[0].mxu0 %v36
    %v509 = vpop.f32.mrb[0].mxu0
    %v510 = vadd.f32 %v469, %v509
    %v511 = vpop.f32.mrb[0].mxu0
    %v512 = vadd.f32 %v471, %v511
    %v513 = vpop.f32.mrb[0].mxu0
    %v514 = vpop.f32.mrb[0].mxu0
    %515 = vdwg.mxu0
    %v516 = vtanh.pop %v510
    %v517 = vtanh.pop %v512
    %v518 = vpack.c.bf16 %v516, %v516
    %v519 = vpack.c.bf16 %v517, %v517
    %v520 = vld [vmem:[%s3] sm:$0xf]
    %v521 = vld [vmem:[%s3 + $0x4] sm:$0xf]
    %v522 = vld [vmem:[%s3 + $0x8] sm:$0xf]
    %v523 = vld [vmem:[%s3 + $0xc] sm:$0xf]
    %v524 = vld [vmem:[%s3 + $0x10] sm:$0xf]
    %v525 = vld [vmem:[%s3 + $0x14] sm:$0xf]
    %v526 = vld [vmem:[%s3 + $0x18] sm:$0xf]
    %v527 = vld [vmem:[%s3 + $0x1c] sm:$0xf]
    %v528 = vld [vmem:[%s3 + $0x20] sm:$0xf]
    %v529 = vld [vmem:[%s3 + $0x24] sm:$0xf]
    %v530 = vld [vmem:[%s3 + $0x28] sm:$0xf]
    %v531 = vld [vmem:[%s3 + $0x2c] sm:$0xf]
    %v532 = vld [vmem:[%s3 + $0x30] sm:$0xf]
    %v533 = vld [vmem:[%s3 + $0x34] sm:$0xf]
    %v534 = vld [vmem:[%s3 + $0x38] sm:$0xf]
    %v535 = vld [vmem:[%s3 + $0x3c] sm:$0xf]
    %v536 = vld [vmem:[%s3 + $0x40] sm:$0xf]
    %v537 = vld [vmem:[%s3 + $0x44] sm:$0xf]
    %v538 = vld [vmem:[%s3 + $0x48] sm:$0xf]
    %v539 = vld [vmem:[%s3 + $0x4c] sm:$0xf]
    %v540 = vld [vmem:[%s3 + $0x50] sm:$0xf]
    %v541 = vld [vmem:[%s3 + $0x54] sm:$0xf]
    %v542 = vld [vmem:[%s3 + $0x58] sm:$0xf]
    %v543 = vld [vmem:[%s3 + $0x5c] sm:$0xf]
    %v544 = vld [vmem:[%s3 + $0x60] sm:$0xf]
    %v545 = vld [vmem:[%s3 + $0x64] sm:$0xf]
    %v546 = vld [vmem:[%s3 + $0x68] sm:$0xf]
    %v547 = vld [vmem:[%s3 + $0x6c] sm:$0xf]
    %v548 = vld [vmem:[%s3 + $0x70] sm:$0xf]
    %v549 = vld [vmem:[%s3 + $0x74] sm:$0xf]
    %v550 = vld [vmem:[%s3 + $0x78] sm:$0xf]
    %v551 = vld [vmem:[%s3 + $0x7c] sm:$0xf]
    %v552 = vld [vmem:[%s4] sm:$0x1]
    %v554 = vlaneseq
    %v555 = vshrl.u32 %v554, 7
    %v556 = vsub.s32 0, %v555
    %v557 = vrot.slane %v552, %v556
    %v591 = vunpack.c.l.b16 %v520
    %v592 = vunpack.c.l.b16 %v521
    %v593 = vunpack.c.l.b16 %v522
    %v594 = vunpack.c.l.b16 %v523
    %v595 = vunpack.c.l.b16 %v524
    %v596 = vunpack.c.l.b16 %v525
    %v597 = vunpack.c.l.b16 %v526
    %v598 = vunpack.c.l.b16 %v527
    %v599 = vunpack.c.l.b16 %v528
    %v600 = vunpack.c.l.b16 %v529
    %v601 = vunpack.c.l.b16 %v530
    %v602 = vunpack.c.l.b16 %v531
    %v603 = vunpack.c.l.b16 %v532
    %v604 = vunpack.c.l.b16 %v533
    %v605 = vunpack.c.l.b16 %v534
    %v606 = vunpack.c.l.b16 %v535
    %v607 = vunpack.c.l.b16 %v536
    %v608 = vunpack.c.l.b16 %v537
    %v609 = vunpack.c.l.b16 %v538
    %v610 = vunpack.c.l.b16 %v539
    %v611 = vunpack.c.l.b16 %v540
    %v612 = vunpack.c.l.b16 %v541
    %v613 = vunpack.c.l.b16 %v542
    %v614 = vunpack.c.l.b16 %v543
    %v615 = vunpack.c.l.b16 %v544
    %v616 = vunpack.c.l.b16 %v545
    %v617 = vunpack.c.l.b16 %v546
    %v618 = vunpack.c.l.b16 %v547
    %v619 = vunpack.c.l.b16 %v548
    %v620 = vunpack.c.l.b16 %v549
    %v621 = vunpack.c.l.b16 %v550
    %v622 = vunpack.c.l.b16 %v551
    %v623 = vpack.c.b16 %v592, %v591
    %v624 = vpack.c.b16 %v594, %v593
    %v625 = vpack.c.b16 %v596, %v595
    %v626 = vpack.c.b16 %v598, %v597
    %v627 = vpack.c.b16 %v600, %v599
    %v628 = vpack.c.b16 %v602, %v601
    %v629 = vpack.c.b16 %v604, %v603
    %v630 = vpack.c.b16 %v606, %v605
    %v631 = vpack.c.b16 %v608, %v607
    %v632 = vpack.c.b16 %v610, %v609
    %v633 = vpack.c.b16 %v612, %v611
    %v634 = vpack.c.b16 %v614, %v613
    %v635 = vpack.c.b16 %v616, %v615
    %v636 = vpack.c.b16 %v618, %v617
    %v637 = vpack.c.b16 %v620, %v619
    %v638 = vpack.c.b16 %v622, %v621
    %655 = vmatprep.subr.bf16.mxu0 0
    %656 = vmatpush1.bf16.msra.mxu0 %v623
    %657 = vmatprep.subr.bf16.mxu0 0
    %658 = vmatpush1.bf16.msra.mxu0 %v624
    %659 = vmatprep.subr.bf16.mxu0 0
    %660 = vmatpush1.bf16.msra.mxu0 %v625
    %661 = vmatprep.subr.bf16.mxu0 0
    %662 = vmatpush1.bf16.msra.mxu0 %v626
    %663 = vmatprep.subr.bf16.mxu0 0
    %664 = vmatpush1.bf16.msra.mxu0 %v627
    %665 = vmatprep.subr.bf16.mxu0 0
    %666 = vmatpush1.bf16.msra.mxu0 %v628
    %667 = vmatprep.subr.bf16.mxu0 0
    %668 = vmatpush1.bf16.msra.mxu0 %v629
    %669 = vmatprep.subr.bf16.mxu0 0
    %670 = vmatpush1.bf16.msra.mxu0 %v630
    %671 = vmatprep.subr.bf16.mxu0 0
    %672 = vmatpush1.bf16.msra.mxu0 %v631
    %673 = vmatprep.subr.bf16.mxu0 0
    %674 = vmatpush1.bf16.msra.mxu0 %v632
    %675 = vmatprep.subr.bf16.mxu0 0
    %676 = vmatpush1.bf16.msra.mxu0 %v633
    %677 = vmatprep.subr.bf16.mxu0 0
    %678 = vmatpush1.bf16.msra.mxu0 %v634
    %679 = vmatprep.subr.bf16.mxu0 0
    %680 = vmatpush1.bf16.msra.mxu0 %v635
    %681 = vmatprep.subr.bf16.mxu0 0
    %682 = vmatpush1.bf16.msra.mxu0 %v636
    %683 = vmatprep.subr.bf16.mxu0 0
    %684 = vmatpush1.bf16.msra.mxu0 %v637
    %685 = vmatprep.subr.bf16.mxu0 0
    %686 = vmatpush1.bf16.msra.mxu0 %v638
    %687 = vmatprep.mubr.bf16.mxu0 %v519
    %688 = vmatmul.mubr.bf16.gmra.mrb[0].mxu0 %v518
    %v689 = vpop.f32.mrb[0].mxu0
    %v690 = vadd.f32 %v557, %v689
    %v691 = vpop.f32.mrb[0].mxu0
    %v692 = vpop.f32.mrb[0].mxu0
    %v693 = vpop.f32.mrb[0].mxu0
    %694 = vdwg.mxu0
    %v695 = vtanh.pop %v690
    %v696 = vld [vmem:[%s5] sm:$0x1]
    %v697 = vld [vmem:[#allocation2] sm:$0x1]
    %699 = vset.pattern.permute.xlu0 0
    %700 = vperm.xlu0 %699, %v697
    %v701 = vpop.permute.xlu0 %700
    %v703 = vlaneseq
    %v704 = vshrl.u32 %v703, 7
    %v705 = vsub.s32 0, %v704
    %v706 = vrot.slane %v701, %v705
    %707 = vmatprep.subr.mxu0 0.0
    %708 = vmatpush1.xpose.msra.mxu0 %v695
    %709 = vmatprep.subr.mxu0 0.0
    %710 = vmatpush1.xpose.msra.mxu0 0.0
    %711 = vmatprep.subr.mxu0 0.0
    %712 = vmatpush1.xpose.msra.mxu0 0.0
    %713 = vmatprep.subr.mxu0 0.0
    %714 = vmatpush1.xpose.msra.mxu0 0.0
    %715 = vmatprep.subr.mxu0 0.0
    %716 = vmatpush1.xpose.msra.mxu0 0.0
    %717 = vmatprep.subr.mxu0 0.0
    %718 = vmatpush1.xpose.msra.mxu0 0.0
    %719 = vmatprep.subr.mxu0 0.0
    %720 = vmatpush1.xpose.msra.mxu0 0.0
    %721 = vmatprep.subr.mxu0 0.0
    %722 = vmatpush1.xpose.msra.mxu0 0.0
    %723 = vmatprep.subr.mxu0 0.0
    %724 = vmatpush1.xpose.msra.mxu0 0.0
    %725 = vmatprep.subr.mxu0 0.0
    %726 = vmatpush1.xpose.msra.mxu0 0.0
    %727 = vmatprep.subr.mxu0 0.0
    %728 = vmatpush1.xpose.msra.mxu0 0.0
    %729 = vmatprep.subr.mxu0 0.0
    %730 = vmatpush1.xpose.msra.mxu0 0.0
    %731 = vmatprep.subr.mxu0 0.0
    %732 = vmatpush1.xpose.msra.mxu0 0.0
    %733 = vmatprep.subr.mxu0 0.0
    %734 = vmatpush1.xpose.msra.mxu0 0.0
    %735 = vmatprep.subr.mxu0 0.0
    %736 = vmatpush1.xpose.msra.mxu0 0.0
    %737 = vmatprep.subr.mxu0 0.0
    %738 = vmatpush1.xpose.msra.mxu0 0.0
    %739 = vmatprep.subr.mxu0 0.0
    %740 = vmatpush1.xpose.msra.mxu0 0.0
    %741 = vmatprep.subr.mxu0 0.0
    %742 = vmatpush1.xpose.msra.mxu0 0.0
    %743 = vmatprep.subr.mxu0 0.0
    %744 = vmatpush1.xpose.msra.mxu0 0.0
    %745 = vmatprep.subr.mxu0 0.0
    %746 = vmatpush1.xpose.msra.mxu0 0.0
    %747 = vmatprep.subr.mxu0 0.0
    %748 = vmatpush1.xpose.msra.mxu0 0.0
    %749 = vmatprep.subr.mxu0 0.0
    %750 = vmatpush1.xpose.msra.mxu0 0.0
    %751 = vmatprep.subr.mxu0 0.0
    %752 = vmatpush1.xpose.msra.mxu0 0.0
    %753 = vmatprep.subr.mxu0 0.0
    %754 = vmatpush1.xpose.msra.mxu0 0.0
    %755 = vmatprep.subr.mxu0 0.0
    %756 = vmatpush1.xpose.msra.mxu0 0.0
    %757 = vmatprep.subr.mxu0 0.0
    %758 = vmatpush1.xpose.msra.mxu0 0.0
    %759 = vmatprep.subr.mxu0 0.0
    %760 = vmatpush1.xpose.msra.mxu0 0.0
    %761 = vmatprep.subr.mxu0 0.0
    %762 = vmatpush1.xpose.msra.mxu0 0.0
    %763 = vmatprep.subr.mxu0 0.0
    %764 = vmatpush1.xpose.msra.mxu0 0.0
    %765 = vmatprep.subr.mxu0 0.0
    %766 = vmatpush1.xpose.msra.mxu0 0.0
    %767 = vmatprep.subr.mxu0 0.0
    %768 = vmatpush1.xpose.msra.mxu0 0.0
    %769 = vmatprep.subr.mxu0 0.0
    %770 = vmatpush1.xpose.msra.mxu0 0.0
    %771 = vmatprep.mubr.f32.mxu0 0.0
    %772 = vmatmul.mubr.f32.gmra.mrb[0].mxu0 %v696
    %v773 = vpop.f32.mrb[0].mxu0
    %v774 = vadd.f32 %v706, %v773
    %v775 = vpop.f32.mrb[0].mxu0
    %776 = vdwg.mxu0
    %v777 = vsub.f32 0.0, %v774
    %v778 = vmul.f32 %v777, 1.442695
    %v779 = vpow.pop %v778
    %v780 = vadd.f32 %v779, 1.0
    %v781 = vrcp.pop %v780
    %v782 = vmul.f32 1.0, %v781
    %vm783 = vcmask 57344
    %784 = vst.msk [vmem:[#allocation3] sm:$0x1] %vm783, %v782
    // Predicated region
    $region30: #{discriminator_forward.1} parent=1 // pred_check
      _
    $region31: #{discriminator_forward.1} parent=1 // pred_check_branch
      %786 = sbr.rel (0) target = $region33
    $region32: #{discriminator_forward.1} parent=1 // pred_region
      %s788 = ssub.s32 16, 16
      %789 = vsyncadd [#allocation4], %s788
      %s791 = sshll.u32 [#allocation3], 4
      %s792 = int_to_ptr.vmem [resolvable:$true] %s791
      %794 = dma.vmem_to_hbm [thread:$0]  %s792, 16, %s7, [#allocation4]
    $region33: #{discriminator_forward.1} parent=1 // pred_fallthru
      _
    // Predicated region
    $region34: #{discriminator_forward.1} parent=1 // pred_check
      _
    $region35: #{discriminator_forward.1} parent=1 // pred_check_branch
      %796 = sbr.rel (0) target = $region37
    $region36: #{discriminator_forward.1} parent=1 // pred_region
      %797 = dma.done [#allocation4], 16
    $region37: #{discriminator_forward.1} parent=1 // pred_fallthru
      _
    %798 = vsyncpa [#allocation4], 1

</llo_original>
